<compile_context>
chip_gen: v6e
topology: v6e:2x2x1
jax: 0.10.0
libtpu: 0.0.40
codegen_flags: <defaults>
</compile_context>

<pallas_src>
import functools

import jax
import jax.numpy as jnp
from jax import lax
from jax.experimental import pallas as pl
from jax.experimental.pallas import tpu as pltpu


def _round_up(x, m):
    return ((x + m - 1) // m) * m


def _pick_lane_tile(bhw, cin, c, dp, op_bytes):
    """Lane-tile size T for the B*H*W axis.

    Budgeted against VMEM (v7x: 64 MiB physical, 32 MiB default scoped) with
    generous headroom, and capped at ceil(bhw/2) so the grid has >= 2
    "parallel" steps (keeps v7x's second TensorCore busy; no-op on v5e/v6e).
    """
    per_lane = (9 * cin * op_bytes * 2      # im2col patches, double-buffered
                + dp * 4 * 2                # prev cell (f32), double-buffered
                + (c + 2 * dp) * 4 * 2      # 3 outputs (f32), double-buffered
                + 4 * dp * 4 * 3)           # gates / activation f32 slabs
    budget = 16 * 1024 * 1024
    t_budget = max(128, (budget // per_lane) // 128 * 128)
    t_half = _round_up(max(128, -(-bhw // 2)), 128)
    return min(t_budget, t_half)


def _grad_update_lstm_kernel(patches_ref, cell_ref, wpack_ref, bpack_ref,
                             w1p_ref, grad_out_ref, hid_out_ref, cell_out_ref):
    # patches_ref : (9*Cin, T)    im2col slab; lanes = flattened (b, h, w)
    # cell_ref    : (Dp, T)       previous cell state (rows D..Dp-1 are zero)
    # wpack_ref   : (4*Dp, 9*Cin) packed gate conv weights (zero pad rows)
    # bpack_ref   : (4*Dp, 1)     packed gate conv bias (f32, zero pad rows)
    # w1p_ref     : (C, Dp)       1x1 ConvGrad weight (zero pad cols, no bias)
    Dp = cell_ref.shape[0]

    # One fused MXU matmul for all 9 taps x 4 gates; pixels stay on lanes.
    gates = jnp.dot(wpack_ref[...], patches_ref[...],
                    preferred_element_type=jnp.float32)        # (4*Dp, T) f32
    gates = gates + bpack_ref[...]

    # Activations on whole Dp-aligned (sublane-tile) blocks.
    # sigmoid(x) = 0.5*tanh(0.5*x) + 0.5  -> a single EUP op per block.
    sig = 0.5 * jnp.tanh(0.5 * gates[:3 * Dp, :]) + 0.5        # (3*Dp, T)
    in_gate = sig[0 * Dp:1 * Dp, :]
    rem_gate = sig[1 * Dp:2 * Dp, :]
    out_gate = sig[2 * Dp:3 * Dp, :]
    cel_gate = jnp.tanh(gates[3 * Dp:, :])                     # (Dp, T)

    # Padded rows: gates pad = 0 (zero weights/bias) and prev_cell pad = 0,
    # so new_cell/new_hidden pad rows come out exactly 0 (safe for the 1x1).
    prev_cell = cell_ref[...].astype(jnp.float32)              # (Dp, T)
    new_cell = rem_gate * prev_cell + in_gate * cel_gate
    new_hidden = out_gate * jnp.tanh(new_cell)

    cell_out_ref[...] = new_cell.astype(cell_out_ref.dtype)
    hid_out_ref[...] = new_hidden.astype(hid_out_ref.dtype)

    # 1x1 conv (ConvGrad, no bias): (C, Dp) @ (Dp, T) -> lane-dense output.
    g_out = jnp.dot(w1p_ref[...], new_hidden.astype(w1p_ref.dtype),
                    preferred_element_type=jnp.float32)
    grad_out_ref[...] = g_out.astype(grad_out_ref.dtype)


@functools.partial(jax.jit, static_argnames=("compute_dtype",))
def grad_update_lstm_forward(hidden, cell, grad, w_gates, b_gates, w_1x1,
                             gradnorm=1.0, *, compute_dtype=jnp.bfloat16):
    """Pallas implementation of model_GradUpdateLSTM.forward (NCHW layout).

    Returns (grad_out, hidden_out, cell_out), each (B, ch, H, W).
    """
    B, C, H, W = grad.shape
    D = hidden.shape[1]
    Cin = C + D
    HW = H * W
    BHW = B * HW
    Dp = _round_up(D, 8)            # pad each gate block to a sublane tile

    op_bytes = jnp.dtype(compute_dtype).itemsize
    T = _pick_lane_tile(BHW, Cin, C, Dp, op_bytes)
    n_tiles = -(-BHW // T)
    BHWp = n_tiles * T

    # ---- glue (one XLA producer fusion): scale, dropout(identity), concat,
    # ---- zero-pad, im2col, and batch->lane merge, so the kernel sees one
    # ---- lane-dense (9*Cin, B*HW) slab. ----
    g_scaled = grad.astype(jnp.float32) / gradnorm
    x = jnp.concatenate([g_scaled.astype(compute_dtype),
                         hidden.astype(compute_dtype)], axis=1)   # (B,Cin,H,W)
    x = jnp.transpose(x, (1, 0, 2, 3))                            # (Cin,B,H,W)
    xpad = jnp.pad(x, ((0, 0), (0, 0), (1, 1), (1, 1)))
    patches = jnp.stack([xpad[:, :, ky:ky + H, kx:kx + W]
                         for ky in range(3) for kx in range(3)], axis=0)
    patches = patches.reshape(9 * Cin, BHW)                       # (9Cin, BHW)
    patches = jnp.pad(patches, ((0, 0), (0, BHWp - BHW)))
    # TODO(synk): at production H*W avoid materializing the 9x im2col slab in
    # HBM: either compiler_params allow_input_fusion=[0] (validate the MLIR)
    # or in-kernel taps (accumulate 9 (4*Dp,Cin)@(Cin,T) dots over shifted
    # views of the padded frame).

    cell_flat = jnp.transpose(cell, (1, 0, 2, 3)).reshape(D, BHW)
    cell_flat = jnp.pad(cell_flat, ((0, Dp - D), (0, BHWp - BHW)))

    # ---- pack gate weights: (4*D, Cin, 3, 3) -> (4*Dp, 9*Cin), tap-major ----
    wg = w_gates.reshape(4, D, Cin, 3, 3)
    wg = jnp.transpose(wg, (0, 1, 3, 4, 2)).reshape(4, D, 9 * Cin)
    wpack = jnp.zeros((4, Dp, 9 * Cin), compute_dtype)
    wpack = wpack.at[:, :D, :].set(wg.astype(compute_dtype))
    wpack = wpack.reshape(4 * Dp, 9 * Cin)

    bpack = jnp.zeros((4, Dp, 1), jnp.float32)
    bpack = bpack.at[:, :D, 0].set(b_gates.astype(jnp.float32).reshape(4, D))
    bpack = bpack.reshape(4 * Dp, 1)

    w1p = jnp.zeros((C, Dp), compute_dtype)
    w1p = w1p.at[:, :D].set(w_1x1.reshape(C, D).astype(compute_dtype))

    out_shapes = (
        jax.ShapeDtypeStruct((C, BHWp), grad.dtype),      # grad out
        jax.ShapeDtypeStruct((Dp, BHWp), hidden.dtype),   # hidden out (padded)
        jax.ShapeDtypeStruct((Dp, BHWp), cell.dtype),     # cell out (padded)
    )

    grid_spec = pltpu.PrefetchScalarGridSpec(
        num_scalar_prefetch=0,
        grid=(n_tiles,),
        in_specs=[
            pl.BlockSpec((9 * Cin, T), lambda j: (0, j)),
            pl.BlockSpec((Dp, T), lambda j: (0, j)),
            pl.BlockSpec((4 * Dp, 9 * Cin), lambda j: (0, 0)),
            pl.BlockSpec((4 * Dp, 1), lambda j: (0, 0)),
            pl.BlockSpec((C, Dp), lambda j: (0, 0)),
        ],
        out_specs=[
            pl.BlockSpec((C, T), lambda j: (0, j)),
            pl.BlockSpec((Dp, T), lambda j: (0, j)),
            pl.BlockSpec((Dp, T), lambda j: (0, j)),
        ],
    )

    grad_out, hid_out, cell_out = pl.pallas_call(
        _grad_update_lstm_kernel,
        out_shape=out_shapes,
        grid_spec=grid_spec,
        # Aliased buffer is the transposed/padded intermediate (not the
        # caller's `cell`), so no donation needed and no defensive copy; the
        # new cell state overwrites it in place.
        input_output_aliases={1: 2},
        compiler_params=pltpu.CompilerParams(
            dimension_semantics=("parallel",)),
    )(patches, cell_flat, wpack, bpack, w1p)

    grad_out = jnp.transpose(grad_out[:, :BHW].reshape(C, B, H, W),
                             (1, 0, 2, 3))
    hid_out = jnp.transpose(hid_out[:D, :BHW].reshape(D, B, H, W),
                            (1, 0, 2, 3))
    cell_out = jnp.transpose(cell_out[:D, :BHW].reshape(D, B, H, W),
                             (1, 0, 2, 3))
    return grad_out, hid_out, cell_out


def reference_forward(hidden, cell, grad, w_gates, b_gates, w_1x1, gradnorm=1.0):
    """Pure-JAX reference (same math as the PyTorch module, NCHW layout)."""
    D = hidden.shape[1]
    C = grad.shape[1]
    x = jnp.concatenate([grad / gradnorm, hidden], axis=1)
    gates = lax.conv_general_dilated(
        x, w_gates, window_strides=(1, 1), padding="SAME",
        dimension_numbers=("NCHW", "OIHW", "NCHW"),
        precision=lax.Precision.HIGHEST)
    gates = gates + b_gates.reshape(1, -1, 1, 1)
    i = jax.nn.sigmoid(gates[:, 0:D])
    r = jax.nn.sigmoid(gates[:, D:2 * D])
    o = jax.nn.sigmoid(gates[:, 2 * D:3 * D])
    g = jnp.tanh(gates[:, 3 * D:4 * D])
    new_cell = r * cell + i * g
    new_hidden = o * jnp.tanh(new_cell)
    grad_out = jnp.einsum("bdhw,cd->bchw", new_hidden, w_1x1.reshape(C, D),
                          precision=lax.Precision.HIGHEST)
    return grad_out, new_hidden, new_cell


if __name__ == "__main__":
    # ShapeData = [C, H, W] (len 3 -> ConvLSTM2d path), DimLSTM=0 -> D = 5*C
    B, C, H, W = 2, 4, 16, 16
    D = 5 * C
    Cin = C + D

    key = jax.random.PRNGKey(0)
    k1, k2, k3, k4, k5, k6 = jax.random.split(key, 6)

    # Deterministic synthetic parameters (PyTorch-style uniform fan-in init),
    # in PyTorch-native layouts.
    bound_g = 1.0 / float((Cin * 9.0) ** 0.5)
    w_gates = jax.random.uniform(k1, (4 * D, Cin, 3, 3), jnp.float32,
                                 -bound_g, bound_g)
    b_gates = jax.random.uniform(k2, (4 * D,), jnp.float32, -bound_g, bound_g)
    bound_1 = 1.0 / float(D ** 0.5)
    w_1x1 = jax.random.uniform(k3, (C, D, 1, 1), jnp.float32, -bound_1, bound_1)

    grad = jax.random.normal(k4, (B, C, H, W), jnp.float32)
    hidden = jax.random.normal(k5, (B, D, H, W), jnp.float32)
    cell = jax.random.normal(k6, (B, D, H, W), jnp.float32)
    gradnorm = 2.0

    g_ref, h_ref, c_ref = reference_forward(hidden, cell, grad, w_gates,
                                            b_gates, w_1x1, gradnorm)

    # f32-operand path: tight validation of the kernel math.
    g32, h32, c32 = jax.block_until_ready(
        grad_update_lstm_forward(hidden, cell, grad, w_gates, b_gates, w_1x1,
                                 gradnorm, compute_dtype=jnp.float32))
    assert jnp.allclose(g32, g_ref, atol=5e-3, rtol=5e-3), "grad mismatch (f32)"
    assert jnp.allclose(h32, h_ref, atol=5e-3, rtol=5e-3), "hidden mismatch (f32)"
    assert jnp.allclose(c32, c_ref, atol=5e-3, rtol=5e-3), "cell mismatch (f32)"

    # Default bf16 matmul-operand path: looser tolerance (expected ~1e-2 drift).
    g_out, h_out, c_out = jax.block_until_ready(
        grad_update_lstm_forward(hidden, cell, grad, w_gates, b_gates, w_1x1,
                                 gradnorm))
    assert jnp.allclose(g_out, g_ref, atol=5e-2, rtol=5e-2), "grad mismatch (bf16)"
    assert jnp.allclose(h_out, h_ref, atol=5e-2, rtol=5e-2), "hidden mismatch (bf16)"
    assert jnp.allclose(c_out, c_ref, atol=5e-2, rtol=5e-2), "cell mismatch (bf16)"

    print("KERNEL_OK")
</pallas_src>

<mosaic_0001>
module attributes {stable_mosaic.version = 11 : i64} {
  func.func @_grad_update_lstm_kernel(%arg0: i32, %arg1: memref<216x256xf32, #tpu.memory_space<vmem>>, %arg2: memref<24x256xf32, #tpu.memory_space<vmem>>, %arg3: memref<96x216xf32, #tpu.memory_space<vmem>>, %arg4: memref<96x1xf32, #tpu.memory_space<vmem>>, %arg5: memref<4x24xf32, #tpu.memory_space<vmem>>, %arg6: memref<4x256xf32, #tpu.memory_space<vmem>>, %arg7: memref<24x256xf32, #tpu.memory_space<vmem>>, %arg8: memref<24x256xf32, #tpu.memory_space<vmem>>) attributes {dimension_semantics = [#tpu.dimension_semantics<parallel>], iteration_bounds = array<i64: 2>, scalar_prefetch = 0 : i64, scratch_operands = 0 : i64, tpu.core_type = #tpu.core_type<tc>, window_params = [{transform_indices = @transform_0, window_bounds = array<i64: 216, 256>}, {transform_indices = @transform_1, window_bounds = array<i64: 24, 256>}, {pipeline_mode = #tpu.pipeline_mode<synchronous>, transform_indices = @transform_2, window_bounds = array<i64: 96, 216>}, {pipeline_mode = #tpu.pipeline_mode<synchronous>, transform_indices = @transform_3, window_bounds = array<i64: 96, 1>}, {pipeline_mode = #tpu.pipeline_mode<synchronous>, transform_indices = @transform_4, window_bounds = array<i64: 4, 24>}, {transform_indices = @transform_5, window_bounds = array<i64: 4, 256>}, {transform_indices = @transform_6, window_bounds = array<i64: 24, 256>}, {transform_indices = @transform_7, window_bounds = array<i64: 24, 256>}]} {
    %c0 = arith.constant 0 : index
    %c0_0 = arith.constant 0 : index
    %0 = vector.load %arg3[%c0, %c0_0] : memref<96x216xf32, #tpu.memory_space<vmem>>, vector<96x216xf32>
    %c0_1 = arith.constant 0 : index
    %c0_2 = arith.constant 0 : index
    %1 = vector.load %arg1[%c0_1, %c0_2] : memref<216x256xf32, #tpu.memory_space<vmem>>, vector<216x256xf32>
    %cst = arith.constant dense<0.000000e+00> : vector<96x256xf32>
    %2 = tpu.matmul %0, %1, %cst {dimension_numbers = #tpu.dot_dimension_numbers<[1], [0], [0], [1], [0, 0, 1, 1], [], []>} : vector<96x216xf32>, vector<216x256xf32>, vector<96x256xf32> -> vector<96x256xf32>
    %c0_3 = arith.constant 0 : index
    %c0_4 = arith.constant 0 : index
    %3 = vector.load %arg4[%c0_3, %c0_4] : memref<96x1xf32, #tpu.memory_space<vmem>>, vector<96x1xf32>
    %4 = vector.broadcast %3 : vector<96x1xf32> to vector<96x256xf32>
    %5 = arith.addf %2, %4 : vector<96x256xf32>
    %6 = vector.extract_strided_slice %5 {offsets = [0, 0], sizes = [72, 256], strides = [1, 1]} : vector<96x256xf32> to vector<72x256xf32>
    %cst_5 = arith.constant 5.000000e-01 : f32
    %7 = vector.broadcast %cst_5 : f32 to vector<72x256xf32>
    %8 = arith.mulf %7, %6 : vector<72x256xf32>
    %9 = math.tanh %8 : vector<72x256xf32>
    %cst_6 = arith.constant 5.000000e-01 : f32
    %10 = vector.broadcast %cst_6 : f32 to vector<72x256xf32>
    %11 = arith.mulf %10, %9 : vector<72x256xf32>
    %cst_7 = arith.constant 5.000000e-01 : f32
    %12 = vector.broadcast %cst_7 : f32 to vector<72x256xf32>
    %13 = arith.addf %11, %12 : vector<72x256xf32>
    %14 = vector.extract_strided_slice %13 {offsets = [0, 0], sizes = [24, 256], strides = [1, 1]} : vector<72x256xf32> to vector<24x256xf32>
    %15 = vector.extract_strided_slice %13 {offsets = [24, 0], sizes = [24, 256], strides = [1, 1]} : vector<72x256xf32> to vector<24x256xf32>
    %16 = vector.extract_strided_slice %13 {offsets = [48, 0], sizes = [24, 256], strides = [1, 1]} : vector<72x256xf32> to vector<24x256xf32>
    %17 = vector.extract_strided_slice %5 {offsets = [72, 0], sizes = [24, 256], strides = [1, 1]} : vector<96x256xf32> to vector<24x256xf32>
    %18 = math.tanh %17 : vector<24x256xf32>
    %c0_8 = arith.constant 0 : index
    %c0_9 = arith.constant 0 : index
    %19 = vector.load %arg2[%c0_8, %c0_9] : memref<24x256xf32, #tpu.memory_space<vmem>>, vector<24x256xf32>
    %20 = arith.mulf %15, %19 : vector<24x256xf32>
    %21 = arith.mulf %14, %18 : vector<24x256xf32>
    %22 = arith.addf %20, %21 : vector<24x256xf32>
    %23 = math.tanh %22 : vector<24x256xf32>
    %24 = arith.mulf %16, %23 : vector<24x256xf32>
    %c0_10 = arith.constant 0 : index
    %c0_11 = arith.constant 0 : index
    %25 = vector.load %arg8[%c0_10, %c0_11] : memref<24x256xf32, #tpu.memory_space<vmem>>, vector<24x256xf32>
    tpu.vector_store %arg8[%c0_10, %c0_11], %22 {strides = array<i32>} : memref<24x256xf32, #tpu.memory_space<vmem>>, vector<24x256xf32>,
    %c0_12 = arith.constant 0 : index
    %c0_13 = arith.constant 0 : index
    %26 = vector.load %arg7[%c0_12, %c0_13] : memref<24x256xf32, #tpu.memory_space<vmem>>, vector<24x256xf32>
    tpu.vector_store %arg7[%c0_12, %c0_13], %24 {strides = array<i32>} : memref<24x256xf32, #tpu.memory_space<vmem>>, vector<24x256xf32>,
    %c0_14 = arith.constant 0 : index
    %c0_15 = arith.constant 0 : index
    %27 = vector.load %arg5[%c0_14, %c0_15] : memref<4x24xf32, #tpu.memory_space<vmem>>, vector<4x24xf32>
    %cst_16 = arith.constant dense<0.000000e+00> : vector<4x256xf32>
    %28 = tpu.matmul %27, %24, %cst_16 {dimension_numbers = #tpu.dot_dimension_numbers<[1], [0], [0], [1], [0, 0, 1, 1], [], []>} : vector<4x24xf32>, vector<24x256xf32>, vector<4x256xf32> -> vector<4x256xf32>
    %c0_17 = arith.constant 0 : index
    %c0_18 = arith.constant 0 : index
    %29 = vector.load %arg6[%c0_17, %c0_18] : memref<4x256xf32, #tpu.memory_space<vmem>>, vector<4x256xf32>
    tpu.vector_store %arg6[%c0_17, %c0_18], %28 {strides = array<i32>} : memref<4x256xf32, #tpu.memory_space<vmem>>, vector<4x256xf32>,
    return
  }
  func.func @transform_0(%arg0: i32) -> (i32, i32) {
    %c0_i32 = arith.constant 0 : i32
    %c0_i32_0 = arith.constant 0 : i32
    return %c0_i32, %arg0 : i32, i32
  }
  func.func @transform_1(%arg0: i32) -> (i32, i32) {
    %c0_i32 = arith.constant 0 : i32
    %c0_i32_0 = arith.constant 0 : i32
    return %c0_i32, %arg0 : i32, i32
  }
  func.func @transform_2(%arg0: i32) -> (i32, i32) {
    %c0_i32 = arith.constant 0 : i32
    %c0_i32_0 = arith.constant 0 : i32
    %c0_i32_1 = arith.constant 0 : i32
    return %c0_i32, %c0_i32_0 : i32, i32
  }
  func.func @transform_3(%arg0: i32) -> (i32, i32) {
    %c0_i32 = arith.constant 0 : i32
    %c0_i32_0 = arith.constant 0 : i32
    %c0_i32_1 = arith.constant 0 : i32
    return %c0_i32, %c0_i32_0 : i32, i32
  }
  func.func @transform_4(%arg0: i32) -> (i32, i32) {
    %c0_i32 = arith.constant 0 : i32
    %c0_i32_0 = arith.constant 0 : i32
    %c0_i32_1 = arith.constant 0 : i32
    return %c0_i32, %c0_i32_0 : i32, i32
  }
  func.func @transform_5(%arg0: i32) -> (i32, i32) {
    %c0_i32 = arith.constant 0 : i32
    %c0_i32_0 = arith.constant 0 : i32
    return %c0_i32, %arg0 : i32, i32
  }
  func.func @transform_6(%arg0: i32) -> (i32, i32) {
    %c0_i32 = arith.constant 0 : i32
    %c0_i32_0 = arith.constant 0 : i32
    return %c0_i32, %arg0 : i32, i32
  }
  func.func @transform_7(%arg0: i32) -> (i32, i32) {
    %c0_i32 = arith.constant 0 : i32
    %c0_i32_0 = arith.constant 0 : i32
    return %c0_i32, %arg0 : i32, i32
  }
}

</mosaic_0001>

<llo_original>
// kernel: grad_update_lstm_forward.1
$region0: #{grad_update_lstm_forward.1}
  #allocation0 [shape = 'u32[]', space=smem, size = 0x4, offset = 0x4, fixed_abs, tag = 'smem constant byte address 0x4 - core index']
  #allocation1 [shape = 'u32[144,128]{1,0:T(1,128)}', space=vmem, size = 0x12000, scoped, tag = 'internal scratch']
  %s0 = inlined_call_operand.vmem [shape: f32[216,512], index: 0, kind: input, shape index: {}]
  %s1 = inlined_call_operand.vmem [shape: f32[24,512], index: 1, kind: input, shape index: {}, may-alias: {1,7}]
  %s2 = inlined_call_operand.vmem [shape: f32[96,216], index: 2, kind: input, shape index: {}]
  %s3 = inlined_call_operand.vmem [shape: f32[96,1], index: 3, kind: input, shape index: {}]
  %s4 = inlined_call_operand.vmem [shape: f32[4,24], index: 4, kind: input, shape index: {}]
  %s5 = inlined_call_operand.vmem [shape: f32[4,512], index: 5, kind: output, shape index: {0}]
  %s6 = inlined_call_operand.vmem [shape: f32[24,512], index: 6, kind: output, shape index: {1}]
  %s7 = inlined_call_operand.vmem [shape: f32[24,512], index: 7, kind: output, shape index: {2}, may-alias: {1,7}]
  %8 = xla_tuple %s5, %s6, %s7
  %s9 = sld [smem:[#allocation0]]
  $region153: #{grad_update_lstm_forward.1} parent=0
    _
  %s11 = ssub.s32 1, %s9
  %s12 = scalar_select 0, %s11, %s9
  $region1: #{grad_update_lstm_forward.1} parent=0
    #allocation2 [shape = 'u8[442368]{0}', space=vmem, size = 0x6c000, scoped, tag = 'input window, operand 0']
    #allocation3 [shape = 'u8[49152]{0}', space=vmem, size = 0xc000, scoped, tag = 'input window, operand 1']
    #allocation4 [shape = 'u8[49152]{0}', space=vmem, size = 0xc000, scoped, tag = 'output window, operand 1']
    #allocation5 [shape = 'u8[49152]{0}', space=vmem, size = 0xc000, scoped, tag = 'output window, operand 2']
    loop: start=0, step=1, limit=4
    $region2: #{grad_update_lstm_forward.1} parent=1 // loop_pre_header
      _
    $region3: #{grad_update_lstm_forward.1} parent=1 // loop_header
      %s14 = sphi 0, %s18
      %p15 = scmp.ge.s32.totalorder %s14, 4
      %s24 = sphi 0, %s26
      %s27 = sphi 0, %s24
      %s28 = sphi 0, %s27
      %s44 = sphi 0, %s28
      %s50 = sphi 0, %s52
      %s53 = sphi 0, %s50
      %s54 = sphi 0, %s53
      %s70 = sphi 0, %s54
      %s74 = sphi 0, %s74
      %s76 = sphi 0, %s74
      %s77 = sphi 0, %s76
      %s91 = sphi 0, %s77
      %s95 = sphi 0, %s95
      %s97 = sphi 0, %s95
      %s98 = sphi 0, %s97
      %s112 = sphi 0, %s98
      %s116 = sphi 0, %s116
      %s118 = sphi 0, %s116
      %s119 = sphi 0, %s118
      %s133 = sphi 0, %s119
      %s139 = sphi 0, %s141
      %s142 = sphi 0, %s139
      %s143 = sphi 0, %s142
      %s159 = sphi 0, %s143
      %s165 = sphi 0, %s167
      %s168 = sphi 0, %s165
      %s169 = sphi 0, %s168
      %s185 = sphi 0, %s169
      %s191 = sphi 0, %s193
      %s194 = sphi 0, %s191
      %s195 = sphi 0, %s194
      %s211 = sphi 0, %s195
    $region4: #{grad_update_lstm_forward.1} parent=1 // loop_header_branch
      %17 = sbr.rel (%p15) target = $region8
    $region5: #{grad_update_lstm_forward.1} parent=1 // loop_body
      %s19 = ssub.s32 %s14, 1
      %s20 = ssub.s32 %s14, 2
      %s21 = sadd.s32 %s14, 1
      %s22 = ssub.s32 %s14, %s21
      %p23 = scmp.eq.s32.totalorder %s22, 0
      %s25 = sadd.s32 %s24, 1
      %s26 = scalar_select %p23, %s24, %s25
      %p29 = pneg %p23
      %p30 = scmp.eq.s32.totalorder %s14, 1
      %p31 = por %p29, %p30
      %p32 = scmp.ne.s32.totalorder %s24, %s27
      %p33 = scmp.eq.s32.totalorder %s14, 0
      %p34 = por %p32, %p33
      %p35 = scmp.ne.s32.totalorder %s24, %s27
      %p36 = scmp.eq.s32.totalorder %s19, 1
      %p37 = por %p35, %p36
      %p38 = scmp.ne.s32.totalorder %s27, %s28
      %p39 = scmp.eq.s32.totalorder %s19, 0
      %p40 = por %p38, %p39
      %p41 = scmp.ne.s32.totalorder %s27, %s28
      %p42 = scmp.eq.s32.totalorder %s20, 1
      %p43 = por %p41, %p42
      %p45 = scmp.ne.s32.totalorder %s28, %s44
      %p46 = scmp.eq.s32.totalorder %s20, 0
      %p47 = por %p45, %p46
      %s48 = ssub.s32 %s14, %s21
      %p49 = scmp.eq.s32.totalorder %s48, 0
      %s51 = sadd.s32 %s50, 1
      %s52 = scalar_select %p49, %s50, %s51
      %p55 = pneg %p49
      %p56 = scmp.eq.s32.totalorder %s14, 1
      %p57 = por %p55, %p56
      %p58 = scmp.ne.s32.totalorder %s50, %s53
      %p59 = scmp.eq.s32.totalorder %s14, 0
      %p60 = por %p58, %p59
      %p61 = scmp.ne.s32.totalorder %s50, %s53
      %p62 = scmp.eq.s32.totalorder %s19, 1
      %p63 = por %p61, %p62
      %p64 = scmp.ne.s32.totalorder %s53, %s54
      %p65 = scmp.eq.s32.totalorder %s19, 0
      %p66 = por %p64, %p65
      %p67 = scmp.ne.s32.totalorder %s53, %s54
      %p68 = scmp.eq.s32.totalorder %s20, 1
      %p69 = por %p67, %p68
      %p71 = scmp.ne.s32.totalorder %s54, %s70
      %p72 = scmp.eq.s32.totalorder %s20, 0
      %p73 = por %p71, %p72
      %s75 = sadd.s32 %s74, 1
      %p78 = scmp.eq.s32.totalorder %s14, 1
      %p79 = scmp.ne.s32.totalorder %s74, %s76
      %p80 = scmp.eq.s32.totalorder %s14, 0
      %p81 = por %p79, %p80
      %p82 = scmp.ne.s32.totalorder %s74, %s76
      %p83 = scmp.eq.s32.totalorder %s19, 1
      %p84 = por %p82, %p83
      %p85 = scmp.ne.s32.totalorder %s76, %s77
      %p86 = scmp.eq.s32.totalorder %s19, 0
      %p87 = por %p85, %p86
      %p88 = scmp.ne.s32.totalorder %s76, %s77
      %p89 = scmp.eq.s32.totalorder %s20, 1
      %p90 = por %p88, %p89
      %p92 = scmp.ne.s32.totalorder %s77, %s91
      %p93 = scmp.eq.s32.totalorder %s20, 0
      %p94 = por %p92, %p93
      %s96 = sadd.s32 %s95, 1
      %p99 = scmp.eq.s32.totalorder %s14, 1
      %p100 = scmp.ne.s32.totalorder %s95, %s97
      %p101 = scmp.eq.s32.totalorder %s14, 0
      %p102 = por %p100, %p101
      %p103 = scmp.ne.s32.totalorder %s95, %s97
      %p104 = scmp.eq.s32.totalorder %s19, 1
      %p105 = por %p103, %p104
      %p106 = scmp.ne.s32.totalorder %s97, %s98
      %p107 = scmp.eq.s32.totalorder %s19, 0
      %p108 = por %p106, %p107
      %p109 = scmp.ne.s32.totalorder %s97, %s98
      %p110 = scmp.eq.s32.totalorder %s20, 1
      %p111 = por %p109, %p110
      %p113 = scmp.ne.s32.totalorder %s98, %s112
      %p114 = scmp.eq.s32.totalorder %s20, 0
      %p115 = por %p113, %p114
      %s117 = sadd.s32 %s116, 1
      %p120 = scmp.eq.s32.totalorder %s14, 1
      %p121 = scmp.ne.s32.totalorder %s116, %s118
      %p122 = scmp.eq.s32.totalorder %s14, 0
      %p123 = por %p121, %p122
      %p124 = scmp.ne.s32.totalorder %s116, %s118
      %p125 = scmp.eq.s32.totalorder %s19, 1
      %p126 = por %p124, %p125
      %p127 = scmp.ne.s32.totalorder %s118, %s119
      %p128 = scmp.eq.s32.totalorder %s19, 0
      %p129 = por %p127, %p128
      %p130 = scmp.ne.s32.totalorder %s118, %s119
      %p131 = scmp.eq.s32.totalorder %s20, 1
      %p132 = por %p130, %p131
      %p134 = scmp.ne.s32.totalorder %s119, %s133
      %p135 = scmp.eq.s32.totalorder %s20, 0
      %p136 = por %p134, %p135
      %s137 = ssub.s32 %s14, %s21
      %p138 = scmp.eq.s32.totalorder %s137, 0
      %s140 = sadd.s32 %s139, 1
      %s141 = scalar_select %p138, %s139, %s140
      %p144 = pneg %p138
      %p145 = scmp.eq.s32.totalorder %s14, 1
      %p146 = por %p144, %p145
      %p147 = scmp.ne.s32.totalorder %s139, %s142
      %p148 = scmp.eq.s32.totalorder %s14, 0
      %p149 = por %p147, %p148
      %p150 = scmp.ne.s32.totalorder %s139, %s142
      %p151 = scmp.eq.s32.totalorder %s19, 1
      %p152 = por %p150, %p151
      %p153 = scmp.ne.s32.totalorder %s142, %s143
      %p154 = scmp.eq.s32.totalorder %s19, 0
      %p155 = por %p153, %p154
      %p156 = scmp.ne.s32.totalorder %s142, %s143
      %p157 = scmp.eq.s32.totalorder %s20, 1
      %p158 = por %p156, %p157
      %p160 = scmp.ne.s32.totalorder %s143, %s159
      %p161 = scmp.eq.s32.totalorder %s20, 0
      %p162 = por %p160, %p161
      %s163 = ssub.s32 %s14, %s21
      %p164 = scmp.eq.s32.totalorder %s163, 0
      %s166 = sadd.s32 %s165, 1
      %s167 = scalar_select %p164, %s165, %s166
      %p170 = pneg %p164
      %p171 = scmp.eq.s32.totalorder %s14, 1
      %p172 = por %p170, %p171
      %p173 = scmp.ne.s32.totalorder %s165, %s168
      %p174 = scmp.eq.s32.totalorder %s14, 0
      %p175 = por %p173, %p174
      %p176 = scmp.ne.s32.totalorder %s165, %s168
      %p177 = scmp.eq.s32.totalorder %s19, 1
      %p178 = por %p176, %p177
      %p179 = scmp.ne.s32.totalorder %s168, %s169
      %p180 = scmp.eq.s32.totalorder %s19, 0
      %p181 = por %p179, %p180
      %p182 = scmp.ne.s32.totalorder %s168, %s169
      %p183 = scmp.eq.s32.totalorder %s20, 1
      %p184 = por %p182, %p183
      %p186 = scmp.ne.s32.totalorder %s169, %s185
      %p187 = scmp.eq.s32.totalorder %s20, 0
      %p188 = por %p186, %p187
      %s189 = ssub.s32 %s14, %s21
      %p190 = scmp.eq.s32.totalorder %s189, 0
      %s192 = sadd.s32 %s191, 1
      %s193 = scalar_select %p190, %s191, %s192
      %p196 = pneg %p190
      %p197 = scmp.eq.s32.totalorder %s14, 1
      %p198 = por %p196, %p197
      %p199 = scmp.ne.s32.totalorder %s191, %s194
      %p200 = scmp.eq.s32.totalorder %s14, 0
      %p201 = por %p199, %p200
      %p202 = scmp.ne.s32.totalorder %s191, %s194
      %p203 = scmp.eq.s32.totalorder %s19, 1
      %p204 = por %p202, %p203
      %p205 = scmp.ne.s32.totalorder %s194, %s195
      %p206 = scmp.eq.s32.totalorder %s19, 0
      %p207 = por %p205, %p206
      %p208 = scmp.ne.s32.totalorder %s194, %s195
      %p209 = scmp.eq.s32.totalorder %s20, 1
      %p210 = por %p208, %p209
      %p212 = scmp.ne.s32.totalorder %s195, %s211
      %p213 = scmp.eq.s32.totalorder %s20, 0
      %p214 = por %p212, %p213
      %p215 = scmp.le.s32.totalorder 1, %s14
      %p216 = scmp.lt.s32.totalorder %s14, 3
      %p217 = pnand %p215, %p216
      %p218 = pneg %p217
      // Predicated region
      $region9: #{grad_update_lstm_forward.1} parent=5 // pred_check
        _
      $region10: #{grad_update_lstm_forward.1} parent=5 // pred_check_branch
        %220 = sbr.rel (%p217) target = $region12
      $region11: #{grad_update_lstm_forward.1} parent=5 // pred_region
        %s221 = ssub.s32 %s14, 1
        // Predicated region
        $region13: #{grad_update_lstm_forward.1} parent=11 // pred_check
          %p222 = pneg %p87
        $region14: #{grad_update_lstm_forward.1} parent=11 // pred_check_branch
          %224 = sbr.rel (%p222) target = $region16
        $region15: #{grad_update_lstm_forward.1} parent=11 // pred_region
          _
        $region16: #{grad_update_lstm_forward.1} parent=11 // pred_fallthru
          _
        // Predicated region
        $region17: #{grad_update_lstm_forward.1} parent=11 // pred_check
          %p225 = pneg %p108
        $region18: #{grad_update_lstm_forward.1} parent=11 // pred_check_branch
          %227 = sbr.rel (%p225) target = $region20
        $region19: #{grad_update_lstm_forward.1} parent=11 // pred_region
          _
        $region20: #{grad_update_lstm_forward.1} parent=11 // pred_fallthru
          _
        // Predicated region
        $region21: #{grad_update_lstm_forward.1} parent=11 // pred_check
          %p228 = pneg %p129
        $region22: #{grad_update_lstm_forward.1} parent=11 // pred_check_branch
          %230 = sbr.rel (%p228) target = $region24
        $region23: #{grad_update_lstm_forward.1} parent=11 // pred_region
          _
        $region24: #{grad_update_lstm_forward.1} parent=11 // pred_fallthru
          _
      $region12: #{grad_update_lstm_forward.1} parent=5 // pred_fallthru
        _
      %p231 = scmp.lt.s32.totalorder %s14, 2
      // Predicated region
      $region25: #{grad_update_lstm_forward.1} parent=5 // pred_check
        %p232 = pneg %p231
      $region26: #{grad_update_lstm_forward.1} parent=5 // pred_check_branch
        %234 = sbr.rel (%p232) target = $region28
      $region27: #{grad_update_lstm_forward.1} parent=5 // pred_region
        // Predicated region
        $region29: #{grad_update_lstm_forward.1} parent=27 // pred_check
          %p235 = pneg %p34
        $region30: #{grad_update_lstm_forward.1} parent=27 // pred_check_branch
          %237 = sbr.rel (%p235) target = $region32
        $region31: #{grad_update_lstm_forward.1} parent=27 // pred_region
          %s238 = sand.u32 %s24, 1
          %s239 = sand.u32 %s24, 1
          %s240 = smul.addr %s239, 432
          %s241 = scalar_lea.vmem [#allocation2], %s240
          %s242 = smul.u32 2, %s14
          %s243 = smul.addr %s242, 8
          %s244 = scalar_lea.vmem %s0, %s243
          // Predicated region
          $region33: #{grad_update_lstm_forward.1} parent=31 // pred_check
            _
          $region34: #{grad_update_lstm_forward.1} parent=31 // pred_check_branch
            %246 = sbr.rel (0) target = $region36
          $region35: #{grad_update_lstm_forward.1} parent=31 // pred_region
            // Predicated region
            $region37: #{grad_update_lstm_forward.1} parent=35 // pred_check
              _
            $region38: #{grad_update_lstm_forward.1} parent=35 // pred_check_branch
              %248 = sbr.rel (0) target = $region40
            $region39: #{grad_update_lstm_forward.1} parent=35 // pred_region
              loop: start=0, step=1, limit=1
              $region41: #{grad_update_lstm_forward.1} parent=39 // loop_pre_header
                _
              $region42: #{grad_update_lstm_forward.1} parent=39 // loop_header
                %s250 = sphi 0, %s254
                %p251 = scmp.ge.s32.totalorder %s250, 1
                %s255 = sphi %s244, %s244
                %s256 = sphi %s241, %s241
              $region43: #{grad_update_lstm_forward.1} parent=39 // loop_header_branch
                %253 = sbr.rel (%p251) target = $region47
              $region44: #{grad_update_lstm_forward.1} parent=39 // loop_body
                %v257 = vld [vmem:[%s255] sm:$0xff]
                %258 = vst [vmem:[%s256] sm:$0xff] %v257
                %v259 = vld [vmem:[%s255 + $0x8] sm:$0xff]
                %260 = vst [vmem:[%s256 + $0x8] sm:$0xff] %v259
                %v261 = vld [vmem:[%s255 + $0x20] sm:$0xff]
                %262 = vst [vmem:[%s256 + $0x10] sm:$0xff] %v261
                %v263 = vld [vmem:[%s255 + $0x28] sm:$0xff]
                %264 = vst [vmem:[%s256 + $0x18] sm:$0xff] %v263
                %v265 = vld [vmem:[%s255 + $0x40] sm:$0xff]
                %266 = vst [vmem:[%s256 + $0x20] sm:$0xff] %v265
                %v267 = vld [vmem:[%s255 + $0x48] sm:$0xff]
                %268 = vst [vmem:[%s256 + $0x28] sm:$0xff] %v267
                %v269 = vld [vmem:[%s255 + $0x60] sm:$0xff]
                %270 = vst [vmem:[%s256 + $0x30] sm:$0xff] %v269
                %v271 = vld [vmem:[%s255 + $0x68] sm:$0xff]
                %272 = vst [vmem:[%s256 + $0x38] sm:$0xff] %v271
                %v273 = vld [vmem:[%s255 + $0x80] sm:$0xff]
                %274 = vst [vmem:[%s256 + $0x40] sm:$0xff] %v273
                %v275 = vld [vmem:[%s255 + $0x88] sm:$0xff]
                %276 = vst [vmem:[%s256 + $0x48] sm:$0xff] %v275
                %v277 = vld [vmem:[%s255 + $0xa0] sm:$0xff]
                %278 = vst [vmem:[%s256 + $0x50] sm:$0xff] %v277
                %v279 = vld [vmem:[%s255 + $0xa8] sm:$0xff]
                %280 = vst [vmem:[%s256 + $0x58] sm:$0xff] %v279
                %v281 = vld [vmem:[%s255 + $0xc0] sm:$0xff]
                %282 = vst [vmem:[%s256 + $0x60] sm:$0xff] %v281
                %v283 = vld [vmem:[%s255 + $0xc8] sm:$0xff]
                %284 = vst [vmem:[%s256 + $0x68] sm:$0xff] %v283
                %v285 = vld [vmem:[%s255 + $0xe0] sm:$0xff]
                %286 = vst [vmem:[%s256 + $0x70] sm:$0xff] %v285
                %v287 = vld [vmem:[%s255 + $0xe8] sm:$0xff]
                %288 = vst [vmem:[%s256 + $0x78] sm:$0xff] %v287
                %v289 = vld [vmem:[%s255 + $0x100] sm:$0xff]
                %290 = vst [vmem:[%s256 + $0x80] sm:$0xff] %v289
                %v291 = vld [vmem:[%s255 + $0x108] sm:$0xff]
                %292 = vst [vmem:[%s256 + $0x88] sm:$0xff] %v291
                %v293 = vld [vmem:[%s255 + $0x120] sm:$0xff]
                %294 = vst [vmem:[%s256 + $0x90] sm:$0xff] %v293
                %v295 = vld [vmem:[%s255 + $0x128] sm:$0xff]
                %296 = vst [vmem:[%s256 + $0x98] sm:$0xff] %v295
                %v297 = vld [vmem:[%s255 + $0x140] sm:$0xff]
                %298 = vst [vmem:[%s256 + $0xa0] sm:$0xff] %v297
                %v299 = vld [vmem:[%s255 + $0x148] sm:$0xff]
                %300 = vst [vmem:[%s256 + $0xa8] sm:$0xff] %v299
                %v301 = vld [vmem:[%s255 + $0x160] sm:$0xff]
                %302 = vst [vmem:[%s256 + $0xb0] sm:$0xff] %v301
                %v303 = vld [vmem:[%s255 + $0x168] sm:$0xff]
                %304 = vst [vmem:[%s256 + $0xb8] sm:$0xff] %v303
                %v305 = vld [vmem:[%s255 + $0x180] sm:$0xff]
                %306 = vst [vmem:[%s256 + $0xc0] sm:$0xff] %v305
                %v307 = vld [vmem:[%s255 + $0x188] sm:$0xff]
                %308 = vst [vmem:[%s256 + $0xc8] sm:$0xff] %v307
                %v309 = vld [vmem:[%s255 + $0x1a0] sm:$0xff]
                %310 = vst [vmem:[%s256 + $0xd0] sm:$0xff] %v309
                %v311 = vld [vmem:[%s255 + $0x1a8] sm:$0xff]
                %312 = vst [vmem:[%s256 + $0xd8] sm:$0xff] %v311
                %v313 = vld [vmem:[%s255 + $0x1c0] sm:$0xff]
                %314 = vst [vmem:[%s256 + $0xe0] sm:$0xff] %v313
                %v315 = vld [vmem:[%s255 + $0x1c8] sm:$0xff]
                %316 = vst [vmem:[%s256 + $0xe8] sm:$0xff] %v315
                %v317 = vld [vmem:[%s255 + $0x1e0] sm:$0xff]
                %318 = vst [vmem:[%s256 + $0xf0] sm:$0xff] %v317
                %v319 = vld [vmem:[%s255 + $0x1e8] sm:$0xff]
                %320 = vst [vmem:[%s256 + $0xf8] sm:$0xff] %v319
                %v321 = vld [vmem:[%s255 + $0x200] sm:$0xff]
                %322 = vst [vmem:[%s256 + $0x100] sm:$0xff] %v321
                %v323 = vld [vmem:[%s255 + $0x208] sm:$0xff]
                %324 = vst [vmem:[%s256 + $0x108] sm:$0xff] %v323
                %v325 = vld [vmem:[%s255 + $0x220] sm:$0xff]
                %326 = vst [vmem:[%s256 + $0x110] sm:$0xff] %v325
                %v327 = vld [vmem:[%s255 + $0x228] sm:$0xff]
                %328 = vst [vmem:[%s256 + $0x118] sm:$0xff] %v327
                %v329 = vld [vmem:[%s255 + $0x240] sm:$0xff]
                %330 = vst [vmem:[%s256 + $0x120] sm:$0xff] %v329
                %v331 = vld [vmem:[%s255 + $0x248] sm:$0xff]
                %332 = vst [vmem:[%s256 + $0x128] sm:$0xff] %v331
                %v333 = vld [vmem:[%s255 + $0x260] sm:$0xff]
                %334 = vst [vmem:[%s256 + $0x130] sm:$0xff] %v333
                %v335 = vld [vmem:[%s255 + $0x268] sm:$0xff]
                %336 = vst [vmem:[%s256 + $0x138] sm:$0xff] %v335
                %v337 = vld [vmem:[%s255 + $0x280] sm:$0xff]
                %338 = vst [vmem:[%s256 + $0x140] sm:$0xff] %v337
                %v339 = vld [vmem:[%s255 + $0x288] sm:$0xff]
                %340 = vst [vmem:[%s256 + $0x148] sm:$0xff] %v339
                %v341 = vld [vmem:[%s255 + $0x2a0] sm:$0xff]
                %342 = vst [vmem:[%s256 + $0x150] sm:$0xff] %v341
                %v343 = vld [vmem:[%s255 + $0x2a8] sm:$0xff]
                %344 = vst [vmem:[%s256 + $0x158] sm:$0xff] %v343
                %v345 = vld [vmem:[%s255 + $0x2c0] sm:$0xff]
                %346 = vst [vmem:[%s256 + $0x160] sm:$0xff] %v345
                %v347 = vld [vmem:[%s255 + $0x2c8] sm:$0xff]
                %348 = vst [vmem:[%s256 + $0x168] sm:$0xff] %v347
                %v349 = vld [vmem:[%s255 + $0x2e0] sm:$0xff]
                %350 = vst [vmem:[%s256 + $0x170] sm:$0xff] %v349
                %v351 = vld [vmem:[%s255 + $0x2e8] sm:$0xff]
                %352 = vst [vmem:[%s256 + $0x178] sm:$0xff] %v351
                %v353 = vld [vmem:[%s255 + $0x300] sm:$0xff]
                %354 = vst [vmem:[%s256 + $0x180] sm:$0xff] %v353
                %v355 = vld [vmem:[%s255 + $0x308] sm:$0xff]
                %356 = vst [vmem:[%s256 + $0x188] sm:$0xff] %v355
                %v357 = vld [vmem:[%s255 + $0x320] sm:$0xff]
                %358 = vst [vmem:[%s256 + $0x190] sm:$0xff] %v357
                %v359 = vld [vmem:[%s255 + $0x328] sm:$0xff]
                %360 = vst [vmem:[%s256 + $0x198] sm:$0xff] %v359
                %v361 = vld [vmem:[%s255 + $0x340] sm:$0xff]
                %362 = vst [vmem:[%s256 + $0x1a0] sm:$0xff] %v361
                %v363 = vld [vmem:[%s255 + $0x348] sm:$0xff]
                %364 = vst [vmem:[%s256 + $0x1a8] sm:$0xff] %v363
              $region45: #{grad_update_lstm_forward.1} parent=39 // loop_footer
                %s254 = sadd.s32 1, %s250
              $region46: #{grad_update_lstm_forward.1} parent=39 // loop_footer_branch
                %249 = sbr.rel target = $region42
              $region47: #{grad_update_lstm_forward.1} parent=39 // loop_exit
                _
            $region40: #{grad_update_lstm_forward.1} parent=35 // pred_fallthru
              _
            // Predicated region
            $region48: #{grad_update_lstm_forward.1} parent=35 // pred_check
              _
            $region49: #{grad_update_lstm_forward.1} parent=35 // pred_check_branch
              %366 = sbr.rel target = $region51
            $region50: #{grad_update_lstm_forward.1} parent=35 // pred_region
              _
            $region51: #{grad_update_lstm_forward.1} parent=35 // pred_fallthru
              _
          $region36: #{grad_update_lstm_forward.1} parent=31 // pred_fallthru
            _
          %367 = vnop
        $region32: #{grad_update_lstm_forward.1} parent=27 // pred_fallthru
          _
        // Predicated region
        $region52: #{grad_update_lstm_forward.1} parent=27 // pred_check
          %p368 = pneg %p60
        $region53: #{grad_update_lstm_forward.1} parent=27 // pred_check_branch
          %370 = sbr.rel (%p368) target = $region55
        $region54: #{grad_update_lstm_forward.1} parent=27 // pred_region
          %s371 = sand.u32 %s50, 1
          %s372 = sand.u32 %s50, 1
          %s373 = smul.addr %s372, 48
          %s374 = scalar_lea.vmem [#allocation3], %s373
          %s375 = smul.u32 2, %s14
          %s376 = smul.addr %s375, 8
          %s377 = scalar_lea.vmem %s1, %s376
          // Predicated region
          $region56: #{grad_update_lstm_forward.1} parent=54 // pred_check
            _
          $region57: #{grad_update_lstm_forward.1} parent=54 // pred_check_branch
            %379 = sbr.rel (0) target = $region59
          $region58: #{grad_update_lstm_forward.1} parent=54 // pred_region
            // Predicated region
            $region60: #{grad_update_lstm_forward.1} parent=58 // pred_check
              _
            $region61: #{grad_update_lstm_forward.1} parent=58 // pred_check_branch
              %381 = sbr.rel (0) target = $region63
            $region62: #{grad_update_lstm_forward.1} parent=58 // pred_region
              loop: start=0, step=1, limit=1
              $region64: #{grad_update_lstm_forward.1} parent=62 // loop_pre_header
                _
              $region65: #{grad_update_lstm_forward.1} parent=62 // loop_header
                %s383 = sphi 0, %s387
                %p384 = scmp.ge.s32.totalorder %s383, 1
                %s388 = sphi %s377, %s377
                %s389 = sphi %s374, %s374
              $region66: #{grad_update_lstm_forward.1} parent=62 // loop_header_branch
                %386 = sbr.rel (%p384) target = $region70
              $region67: #{grad_update_lstm_forward.1} parent=62 // loop_body
                %v390 = vld [vmem:[%s388] sm:$0xff]
                %391 = vst [vmem:[%s389] sm:$0xff] %v390
                %v392 = vld [vmem:[%s388 + $0x8] sm:$0xff]
                %393 = vst [vmem:[%s389 + $0x8] sm:$0xff] %v392
                %v394 = vld [vmem:[%s388 + $0x20] sm:$0xff]
                %395 = vst [vmem:[%s389 + $0x10] sm:$0xff] %v394
                %v396 = vld [vmem:[%s388 + $0x28] sm:$0xff]
                %397 = vst [vmem:[%s389 + $0x18] sm:$0xff] %v396
                %v398 = vld [vmem:[%s388 + $0x40] sm:$0xff]
                %399 = vst [vmem:[%s389 + $0x20] sm:$0xff] %v398
                %v400 = vld [vmem:[%s388 + $0x48] sm:$0xff]
                %401 = vst [vmem:[%s389 + $0x28] sm:$0xff] %v400
              $region68: #{grad_update_lstm_forward.1} parent=62 // loop_footer
                %s387 = sadd.s32 1, %s383
              $region69: #{grad_update_lstm_forward.1} parent=62 // loop_footer_branch
                %382 = sbr.rel target = $region65
              $region70: #{grad_update_lstm_forward.1} parent=62 // loop_exit
                _
            $region63: #{grad_update_lstm_forward.1} parent=58 // pred_fallthru
              _
            // Predicated region
            $region71: #{grad_update_lstm_forward.1} parent=58 // pred_check
              _
            $region72: #{grad_update_lstm_forward.1} parent=58 // pred_check_branch
              %403 = sbr.rel target = $region74
            $region73: #{grad_update_lstm_forward.1} parent=58 // pred_region
              _
            $region74: #{grad_update_lstm_forward.1} parent=58 // pred_fallthru
              _
          $region59: #{grad_update_lstm_forward.1} parent=54 // pred_fallthru
            _
          %404 = vnop
        $region55: #{grad_update_lstm_forward.1} parent=27 // pred_fallthru
          _
      $region28: #{grad_update_lstm_forward.1} parent=5 // pred_fallthru
        _
      %p405 = scmp.le.s32.totalorder 1, %s14
      %p406 = scmp.lt.s32.totalorder %s14, 3
      %p407 = pnand %p405, %p406
      %p408 = pneg %p407
      // Predicated region
      $region75: #{grad_update_lstm_forward.1} parent=5 // pred_check
        _
      $region76: #{grad_update_lstm_forward.1} parent=5 // pred_check_branch
        %410 = sbr.rel (%p407) target = $region78
      $region77: #{grad_update_lstm_forward.1} parent=5 // pred_region
        %s411 = ssub.s32 %s14, 1
        %s412 = sand.u32 %s27, 1
        %s413 = sand.u32 %s27, 1
        %s414 = smul.addr %s413, 432
        %s415 = scalar_lea.vmem [#allocation2], %s414
        // Predicated region
        $region79: #{grad_update_lstm_forward.1} parent=77 // pred_check
          %p416 = pneg %p40
        $region80: #{grad_update_lstm_forward.1} parent=77 // pred_check_branch
          %418 = sbr.rel (%p416) target = $region82
        $region81: #{grad_update_lstm_forward.1} parent=77 // pred_region
          _
        $region82: #{grad_update_lstm_forward.1} parent=77 // pred_fallthru
          _
        %s419 = sand.u32 %s53, 1
        %s420 = sand.u32 %s53, 1
        %s421 = smul.addr %s420, 48
        %s422 = scalar_lea.vmem [#allocation3], %s421
        // Predicated region
        $region83: #{grad_update_lstm_forward.1} parent=77 // pred_check
          %p423 = pneg %p66
        $region84: #{grad_update_lstm_forward.1} parent=77 // pred_check_branch
          %425 = sbr.rel (%p423) target = $region86
        $region85: #{grad_update_lstm_forward.1} parent=77 // pred_region
          _
        $region86: #{grad_update_lstm_forward.1} parent=77 // pred_fallthru
          _
        %s426 = sand.u32 %s27, 1
        %s427 = sand.u32 %s27, 1
        %s428 = smul.addr %s427, 432
        %s429 = scalar_lea.vmem [#allocation2], %s428
        %p430 = pneg %p40
        %p431 = pneg %p37
        %s432 = sand.u32 %s53, 1
        %s433 = sand.u32 %s53, 1
        %s434 = smul.addr %s433, 48
        %s435 = scalar_lea.vmem [#allocation3], %s434
        %p436 = pneg %p66
        %p437 = pneg %p63
        %p438 = pneg %p87
        %p439 = pneg %p84
        %p440 = pneg %p108
        %p441 = pneg %p105
        %p442 = pneg %p129
        %p443 = pneg %p126
        %p444 = pneg %p155
        %p445 = pneg %p152
        %s446 = smul.u32 2, %s19
        %p447 = scmp.lt.s32.totalorder %s446, 3
        %s448 = scalar_select %p447, %s446, 3
        %s449 = smul.addr %s448, 4
        %s450 = scalar_lea.vmem %s5, %s449
        %p451 = pneg %p181
        %p452 = pneg %p178
        %s453 = sand.u32 %s168, 1
        %s454 = sand.u32 %s168, 1
        %s455 = smul.addr %s454, 48
        %s456 = scalar_lea.vmem [#allocation4], %s455
        %p457 = pneg %p207
        %p458 = pneg %p204
        %s459 = sand.u32 %s194, 1
        %s460 = sand.u32 %s194, 1
        %s461 = smul.addr %s460, 48
        %s462 = scalar_lea.vmem [#allocation5], %s461
        %s463 = smul.u32 2, %s19
        %s464 = smul.u32 2, %s19
        %s465 = smul.u32 2, %s19
        %p466 = scmp.lt.s32.totalorder %s465, 3
        %s467 = scalar_select %p466, %s465, 3
        %s468 = smul.addr %s467, 4
        %s469 = scalar_lea.vmem %s5, %s468
        %s470 = smul.u32 2, %s19
        %s471 = smul.u32 2, %s19
        %s472 = smul.u32 2, %s19
        %v473 = vld [vmem:[%s2] sm:$0xff]
        %v474 = vld [vmem:[%s2 + $0x8] sm:$0xff]
        %v475 = vld [vmem:[%s2 + $0x10] sm:$0xff]
        %v476 = vld [vmem:[%s2 + $0x18] sm:$0xff]
        %v477 = vld [vmem:[%s2 + $0x20] sm:$0xff]
        %v478 = vld [vmem:[%s2 + $0x28] sm:$0xff]
        %v479 = vld [vmem:[%s2 + $0x30] sm:$0xff]
        %v480 = vld [vmem:[%s2 + $0x38] sm:$0xff]
        %v481 = vld [vmem:[%s2 + $0x40] sm:$0xff]
        %v482 = vld [vmem:[%s2 + $0x48] sm:$0xff]
        %v483 = vld [vmem:[%s2 + $0x50] sm:$0xff]
        %v484 = vld [vmem:[%s2 + $0x58] sm:$0xff]
        %v485 = vld [vmem:[%s2 + $0x60] sm:$0xff]
        %v486 = vld [vmem:[%s2 + $0x68] sm:$0xff]
        %v487 = vld [vmem:[%s2 + $0x70] sm:$0xff]
        %v488 = vld [vmem:[%s2 + $0x78] sm:$0xff]
        %v489 = vld [vmem:[%s2 + $0x80] sm:$0xff]
        %v490 = vld [vmem:[%s2 + $0x88] sm:$0xff]
        %v491 = vld [vmem:[%s2 + $0x90] sm:$0xff]
        %v492 = vld [vmem:[%s2 + $0x98] sm:$0xff]
        %v493 = vld [vmem:[%s2 + $0xa0] sm:$0xff]
        %v494 = vld [vmem:[%s2 + $0xa8] sm:$0xff]
        %v495 = vld [vmem:[%s2 + $0xb0] sm:$0xff]
        %v496 = vld [vmem:[%s2 + $0xb8] sm:$0xff]
        %v497 = vld [vmem:[%s415] sm:$0xff]
        %v498 = vld [vmem:[%s415 + $0x8] sm:$0xff]
        %v499 = vld [vmem:[%s415 + $0x10] sm:$0xff]
        %v500 = vld [vmem:[%s415 + $0x18] sm:$0xff]
        %v501 = vld [vmem:[%s415 + $0x20] sm:$0xff]
        %v502 = vld [vmem:[%s415 + $0x28] sm:$0xff]
        %v503 = vld [vmem:[%s415 + $0x30] sm:$0xff]
        %v504 = vld [vmem:[%s415 + $0x38] sm:$0xff]
        %v505 = vld [vmem:[%s415 + $0x40] sm:$0xff]
        %v506 = vld [vmem:[%s415 + $0x48] sm:$0xff]
        %v507 = vld [vmem:[%s415 + $0x50] sm:$0xff]
        %v508 = vld [vmem:[%s415 + $0x58] sm:$0xff]
        %v509 = vld [vmem:[%s415 + $0x60] sm:$0xff]
        %v510 = vld [vmem:[%s415 + $0x68] sm:$0xff]
        %v511 = vld [vmem:[%s415 + $0x70] sm:$0xff]
        %v512 = vld [vmem:[%s415 + $0x78] sm:$0xff]
        %v513 = vld [vmem:[%s415 + $0x80] sm:$0xff]
        %v514 = vld [vmem:[%s415 + $0x88] sm:$0xff]
        %v515 = vld [vmem:[%s415 + $0x90] sm:$0xff]
        %v516 = vld [vmem:[%s415 + $0x98] sm:$0xff]
        %v517 = vld [vmem:[%s415 + $0xa0] sm:$0xff]
        %v518 = vld [vmem:[%s415 + $0xa8] sm:$0xff]
        %v519 = vld [vmem:[%s415 + $0xb0] sm:$0xff]
        %v520 = vld [vmem:[%s415 + $0xb8] sm:$0xff]
        %v521 = vld [vmem:[%s415 + $0xc0] sm:$0xff]
        %v522 = vld [vmem:[%s415 + $0xc8] sm:$0xff]
        %v523 = vld [vmem:[%s415 + $0xd0] sm:$0xff]
        %v524 = vld [vmem:[%s415 + $0xd8] sm:$0xff]
        %v525 = vld [vmem:[%s415 + $0xe0] sm:$0xff]
        %v526 = vld [vmem:[%s415 + $0xe8] sm:$0xff]
        %v527 = vld [vmem:[%s415 + $0xf0] sm:$0xff]
        %v528 = vld [vmem:[%s415 + $0xf8] sm:$0xff]
        %v529 = vld [vmem:[%s415 + $0x100] sm:$0xff]
        %v530 = vld [vmem:[%s415 + $0x108] sm:$0xff]
        %v531 = vld [vmem:[%s415 + $0x110] sm:$0xff]
        %v532 = vld [vmem:[%s415 + $0x118] sm:$0xff]
        %v533 = vld [vmem:[%s415 + $0x120] sm:$0xff]
        %v534 = vld [vmem:[%s415 + $0x128] sm:$0xff]
        %v535 = vld [vmem:[%s415 + $0x130] sm:$0xff]
        %v536 = vld [vmem:[%s415 + $0x138] sm:$0xff]
        %v537 = vld [vmem:[%s415 + $0x140] sm:$0xff]
        %v538 = vld [vmem:[%s415 + $0x148] sm:$0xff]
        %v539 = vld [vmem:[%s415 + $0x150] sm:$0xff]
        %v540 = vld [vmem:[%s415 + $0x158] sm:$0xff]
        %v541 = vld [vmem:[%s415 + $0x160] sm:$0xff]
        %v542 = vld [vmem:[%s415 + $0x168] sm:$0xff]
        %v543 = vld [vmem:[%s415 + $0x170] sm:$0xff]
        %v544 = vld [vmem:[%s415 + $0x178] sm:$0xff]
        %v545 = vld [vmem:[%s415 + $0x180] sm:$0xff]
        %v546 = vld [vmem:[%s415 + $0x188] sm:$0xff]
        %v547 = vld [vmem:[%s415 + $0x190] sm:$0xff]
        %v548 = vld [vmem:[%s415 + $0x198] sm:$0xff]
        %v549 = vld [vmem:[%s415 + $0x1a0] sm:$0xff]
        %v550 = vld [vmem:[%s415 + $0x1a8] sm:$0xff]
        %v551 = vld [vmem:[%s3] sm:$0xff]
        %v552 = vld [vmem:[%s3 + $0x8] sm:$0xff]
        %v553 = vld [vmem:[%s3 + $0x10] sm:$0xff]
        %v554 = vld [vmem:[%s3 + $0x18] sm:$0xff]
        %v555 = vld [vmem:[%s3 + $0x20] sm:$0xff]
        %v556 = vld [vmem:[%s3 + $0x28] sm:$0xff]
        %v557 = vld [vmem:[%s3 + $0x30] sm:$0xff]
        %v558 = vld [vmem:[%s3 + $0x38] sm:$0xff]
        %v559 = vld [vmem:[%s3 + $0x40] sm:$0xff]
        %v560 = vld [vmem:[%s3 + $0x48] sm:$0xff]
        %v561 = vld [vmem:[%s3 + $0x50] sm:$0xff]
        %v562 = vld [vmem:[%s3 + $0x58] sm:$0xff]
        %564 = vset.pattern.permute.xlu0 0
        %565 = vperm.xlu0 %564, %v551
        %v566 = vpop.permute.xlu0 %565
        %569 = vset.pattern.permute.xlu0 0
        %570 = vperm.xlu0 %569, %v552
        %v571 = vpop.permute.xlu0 %570
        %574 = vset.pattern.permute.xlu0 0
        %575 = vperm.xlu0 %574, %v553
        %v576 = vpop.permute.xlu0 %575
        %579 = vset.pattern.permute.xlu0 0
        %580 = vperm.xlu0 %579, %v554
        %v581 = vpop.permute.xlu0 %580
        %584 = vset.pattern.permute.xlu0 0
        %585 = vperm.xlu0 %584, %v555
        %v586 = vpop.permute.xlu0 %585
        %589 = vset.pattern.permute.xlu0 0
        %590 = vperm.xlu0 %589, %v556
        %v591 = vpop.permute.xlu0 %590
        %594 = vset.pattern.permute.xlu0 0
        %595 = vperm.xlu0 %594, %v557
        %v596 = vpop.permute.xlu0 %595
        %599 = vset.pattern.permute.xlu0 0
        %600 = vperm.xlu0 %599, %v558
        %v601 = vpop.permute.xlu0 %600
        %604 = vset.pattern.permute.xlu0 0
        %605 = vperm.xlu0 %604, %v559
        %v606 = vpop.permute.xlu0 %605
        %609 = vset.pattern.permute.xlu0 0
        %610 = vperm.xlu0 %609, %v560
        %v611 = vpop.permute.xlu0 %610
        %614 = vset.pattern.permute.xlu0 0
        %615 = vperm.xlu0 %614, %v561
        %v616 = vpop.permute.xlu0 %615
        %619 = vset.pattern.permute.xlu0 0
        %620 = vperm.xlu0 %619, %v562
        %v621 = vpop.permute.xlu0 %620
        %vm623 = vcmask 719872
        %v625 = vsel %vm623, %v474, 0
        %v628 = vsel %vm623, %v476, 0
        %v631 = vsel %vm623, %v478, 0
        %v634 = vsel %vm623, %v480, 0
        %v637 = vsel %vm623, %v482, 0
        %v640 = vsel %vm623, %v484, 0
        %v643 = vsel %vm623, %v486, 0
        %v646 = vsel %vm623, %v488, 0
        %v649 = vsel %vm623, %v490, 0
        %v652 = vsel %vm623, %v492, 0
        %v655 = vsel %vm623, %v494, 0
        %v658 = vsel %vm623, %v496, 0
        %660 = vmatprep.subr.mxu0 %v528
        %661 = vmatpush1.msra.mxu0 %v527
        %662 = vmatprep.subr.mxu0 %v526
        %663 = vmatpush1.msra.mxu0 %v525
        %664 = vmatprep.subr.mxu0 %v524
        %665 = vmatpush1.msra.mxu0 %v523
        %666 = vmatprep.subr.mxu0 %v522
        %667 = vmatpush1.msra.mxu0 %v521
        %668 = vmatprep.subr.mxu0 %v520
        %669 = vmatpush1.msra.mxu0 %v519
        %670 = vmatprep.subr.mxu0 %v518
        %671 = vmatpush1.msra.mxu0 %v517
        %672 = vmatprep.subr.mxu0 %v516
        %673 = vmatpush1.msra.mxu0 %v515
        %674 = vmatprep.subr.mxu0 %v514
        %675 = vmatpush1.msra.mxu0 %v513
        %676 = vmatprep.subr.mxu0 %v512
        %677 = vmatpush1.msra.mxu0 %v511
        %678 = vmatprep.subr.mxu0 %v510
        %679 = vmatpush1.msra.mxu0 %v509
        %680 = vmatprep.subr.mxu0 %v508
        %681 = vmatpush1.msra.mxu0 %v507
        %682 = vmatprep.subr.mxu0 %v506
        %683 = vmatpush1.msra.mxu0 %v505
        %684 = vmatprep.subr.mxu0 %v504
        %685 = vmatpush1.msra.mxu0 %v503
        %686 = vmatprep.subr.mxu0 %v502
        %687 = vmatpush1.msra.mxu0 %v501
        %688 = vmatprep.subr.mxu0 %v500
        %689 = vmatpush1.msra.mxu0 %v499
        %690 = vmatprep.subr.mxu0 %v498
        %691 = vmatpush1.msra.mxu0 %v497
        %692 = vmatprep.subr.mxu0 0.0
        %693 = vmatpush2.msra.mxu0 0.0
        %694 = vmatprep.subr.mxu0 0.0
        %695 = vmatpush2.msra.mxu0 0.0
        %696 = vmatprep.subr.mxu0 0.0
        %697 = vmatpush2.msra.mxu0 0.0
        %698 = vmatprep.subr.mxu0 0.0
        %699 = vmatpush2.msra.mxu0 0.0
        %700 = vmatprep.subr.mxu0 0.0
        %701 = vmatpush2.msra.mxu0 0.0
        %702 = vmatprep.subr.mxu0 %v550
        %703 = vmatpush2.msra.mxu0 %v549
        %704 = vmatprep.subr.mxu0 %v548
        %705 = vmatpush2.msra.mxu0 %v547
        %706 = vmatprep.subr.mxu0 %v546
        %707 = vmatpush2.msra.mxu0 %v545
        %708 = vmatprep.subr.mxu0 %v544
        %709 = vmatpush2.msra.mxu0 %v543
        %710 = vmatprep.subr.mxu0 %v542
        %711 = vmatpush2.msra.mxu0 %v541
        %712 = vmatprep.subr.mxu0 %v540
        %713 = vmatpush2.msra.mxu0 %v539
        %714 = vmatprep.subr.mxu0 %v538
        %715 = vmatpush2.msra.mxu0 %v537
        %716 = vmatprep.subr.mxu0 %v536
        %717 = vmatpush2.msra.mxu0 %v535
        %718 = vmatprep.subr.mxu0 %v534
        %719 = vmatpush2.msra.mxu0 %v533
        %720 = vmatprep.subr.mxu0 %v532
        %721 = vmatpush2.msra.mxu0 %v531
        %722 = vmatprep.subr.mxu0 %v530
        %723 = vmatpush2.msra.mxu0 %v529
        %724 = vmatprep.mubr.f32.mxu0 %v625
        %725 = vmatmul.mubr.f32.gmra.mxu0 %v473
        %v726 = vpop.f32.mrf.mxu0
        %v727 = vadd.f32 %v566, %v726
        %v728 = vpop.f32.mrf.mxu0
        %v729 = vadd.f32 %v566, %v728
        %730 = vmatprep.mubr.f32.mxu0 %v628
        %731 = vmatmul.mubr.f32.gmra.mxu0 %v475
        %v732 = vpop.f32.mrf.mxu0
        %v733 = vadd.f32 %v571, %v732
        %v734 = vpop.f32.mrf.mxu0
        %v735 = vadd.f32 %v571, %v734
        %736 = vmatprep.mubr.f32.mxu0 %v631
        %737 = vmatmul.mubr.f32.gmra.mxu0 %v477
        %v738 = vpop.f32.mrf.mxu0
        %v739 = vadd.f32 %v576, %v738
        %v740 = vpop.f32.mrf.mxu0
        %v741 = vadd.f32 %v576, %v740
        %742 = vmatprep.mubr.f32.mxu0 %v634
        %743 = vmatmul.mubr.f32.gmra.mxu0 %v479
        %v744 = vpop.f32.mrf.mxu0
        %v745 = vadd.f32 %v581, %v744
        %v746 = vpop.f32.mrf.mxu0
        %v747 = vadd.f32 %v581, %v746
        %748 = vmatprep.mubr.f32.mxu0 %v637
        %749 = vmatmul.mubr.f32.gmra.mxu0 %v481
        %v750 = vpop.f32.mrf.mxu0
        %v751 = vadd.f32 %v586, %v750
        %v752 = vpop.f32.mrf.mxu0
        %v753 = vadd.f32 %v586, %v752
        %754 = vmatprep.mubr.f32.mxu0 %v640
        %755 = vmatmul.mubr.f32.gmra.mxu0 %v483
        %v756 = vpop.f32.mrf.mxu0
        %v757 = vadd.f32 %v591, %v756
        %v758 = vpop.f32.mrf.mxu0
        %v759 = vadd.f32 %v591, %v758
        %760 = vmatprep.mubr.f32.mxu0 %v643
        %761 = vmatmul.mubr.f32.gmra.mxu0 %v485
        %v762 = vpop.f32.mrf.mxu0
        %v763 = vadd.f32 %v596, %v762
        %v764 = vpop.f32.mrf.mxu0
        %v765 = vadd.f32 %v596, %v764
        %766 = vmatprep.mubr.f32.mxu0 %v646
        %767 = vmatmul.mubr.f32.gmra.mxu0 %v487
        %v768 = vpop.f32.mrf.mxu0
        %v769 = vadd.f32 %v601, %v768
        %v770 = vpop.f32.mrf.mxu0
        %v771 = vadd.f32 %v601, %v770
        %772 = vmatprep.mubr.f32.mxu0 %v649
        %773 = vmatmul.mubr.f32.gmra.mxu0 %v489
        %v774 = vpop.f32.mrf.mxu0
        %v775 = vadd.f32 %v606, %v774
        %v776 = vpop.f32.mrf.mxu0
        %v777 = vadd.f32 %v606, %v776
        %778 = vmatprep.mubr.f32.mxu0 %v652
        %779 = vmatmul.mubr.f32.gmra.mxu0 %v491
        %v780 = vpop.f32.mrf.mxu0
        %v781 = vadd.f32 %v611, %v780
        %v782 = vpop.f32.mrf.mxu0
        %v783 = vadd.f32 %v611, %v782
        %784 = vmatprep.mubr.f32.mxu0 %v655
        %785 = vmatmul.mubr.f32.gmra.mxu0 %v493
        %v786 = vpop.f32.mrf.mxu0
        %v787 = vadd.f32 %v616, %v786
        %v788 = vpop.f32.mrf.mxu0
        %v789 = vadd.f32 %v616, %v788
        %790 = vmatprep.mubr.f32.mxu0 %v658
        %791 = vmatmul.mubr.f32.gmra.mxu0 %v495
        %v792 = vpop.f32.mrf.mxu0
        %v793 = vadd.f32 %v621, %v792
        %v794 = vpop.f32.mrf.mxu0
        %v795 = vadd.f32 %v621, %v794
        %796 = vdwg.mxu0
        %v797 = vmul.f32 %v727, 0.5
        %v798 = vmul.f32 %v729, 0.5
        %v799 = vmul.f32 %v733, 0.5
        %v800 = vmul.f32 %v735, 0.5
        %v801 = vmul.f32 %v739, 0.5
        %v802 = vmul.f32 %v741, 0.5
        %v803 = vmul.f32 %v745, 0.5
        %v804 = vmul.f32 %v747, 0.5
        %v805 = vmul.f32 %v751, 0.5
        %v806 = vmul.f32 %v753, 0.5
        %v807 = vmul.f32 %v757, 0.5
        %v808 = vmul.f32 %v759, 0.5
        %v809 = vmul.f32 %v763, 0.5
        %v810 = vmul.f32 %v765, 0.5
        %v811 = vmul.f32 %v769, 0.5
        %v812 = vmul.f32 %v771, 0.5
        %v813 = vmul.f32 %v775, 0.5
        %v814 = vmul.f32 %v777, 0.5
        %v815 = vtanh.pop %v797
        %v816 = vtanh.pop %v798
        %v817 = vtanh.pop %v799
        %v818 = vtanh.pop %v800
        %v819 = vtanh.pop %v801
        %v820 = vtanh.pop %v802
        %v821 = vtanh.pop %v803
        %v822 = vtanh.pop %v804
        %v823 = vtanh.pop %v805
        %v824 = vtanh.pop %v806
        %v825 = vtanh.pop %v807
        %v826 = vtanh.pop %v808
        %v827 = vtanh.pop %v809
        %v828 = vtanh.pop %v810
        %v829 = vtanh.pop %v811
        %v830 = vtanh.pop %v812
        %v831 = vtanh.pop %v813
        %v832 = vtanh.pop %v814
        %v833 = vmul.f32 %v815, 0.5
        %v834 = vmul.f32 %v816, 0.5
        %v835 = vmul.f32 %v817, 0.5
        %v836 = vmul.f32 %v818, 0.5
        %v837 = vmul.f32 %v819, 0.5
        %v838 = vmul.f32 %v820, 0.5
        %v839 = vmul.f32 %v821, 0.5
        %v840 = vmul.f32 %v822, 0.5
        %v841 = vmul.f32 %v823, 0.5
        %v842 = vmul.f32 %v824, 0.5
        %v843 = vmul.f32 %v825, 0.5
        %v844 = vmul.f32 %v826, 0.5
        %v845 = vmul.f32 %v827, 0.5
        %v846 = vmul.f32 %v828, 0.5
        %v847 = vmul.f32 %v829, 0.5
        %v848 = vmul.f32 %v830, 0.5
        %v849 = vmul.f32 %v831, 0.5
        %v850 = vmul.f32 %v832, 0.5
        %v851 = vadd.f32 %v833, 0.5
        %v852 = vadd.f32 %v834, 0.5
        %v853 = vadd.f32 %v835, 0.5
        %v854 = vadd.f32 %v836, 0.5
        %v855 = vadd.f32 %v837, 0.5
        %v856 = vadd.f32 %v838, 0.5
        %v857 = vadd.f32 %v839, 0.5
        %v858 = vadd.f32 %v840, 0.5
        %v859 = vadd.f32 %v841, 0.5
        %v860 = vadd.f32 %v842, 0.5
        %v861 = vadd.f32 %v843, 0.5
        %v862 = vadd.f32 %v844, 0.5
        %v863 = vadd.f32 %v845, 0.5
        %v864 = vadd.f32 %v846, 0.5
        %v865 = vadd.f32 %v847, 0.5
        %v866 = vadd.f32 %v848, 0.5
        %v867 = vadd.f32 %v849, 0.5
        %v868 = vadd.f32 %v850, 0.5
        %v869 = vtanh.pop %v781
        %v870 = vtanh.pop %v783
        %v871 = vtanh.pop %v787
        %v872 = vtanh.pop %v789
        %v873 = vtanh.pop %v793
        %v874 = vtanh.pop %v795
        %v875 = vld [vmem:[%s422] sm:$0xff]
        %v876 = vld [vmem:[%s422 + $0x8] sm:$0xff]
        %v877 = vld [vmem:[%s422 + $0x10] sm:$0xff]
        %v878 = vld [vmem:[%s422 + $0x18] sm:$0xff]
        %v879 = vld [vmem:[%s422 + $0x20] sm:$0xff]
        %v880 = vld [vmem:[%s422 + $0x28] sm:$0xff]
        %v881 = vmul.f32 %v857, %v875
        %v882 = vmul.f32 %v858, %v876
        %v883 = vmul.f32 %v859, %v877
        %v884 = vmul.f32 %v860, %v878
        %v885 = vmul.f32 %v861, %v879
        %v886 = vmul.f32 %v862, %v880
        %v887 = vmul.f32 %v851, %v869
        %v888 = vmul.f32 %v852, %v870
        %v889 = vmul.f32 %v853, %v871
        %v890 = vmul.f32 %v854, %v872
        %v891 = vmul.f32 %v855, %v873
        %v892 = vmul.f32 %v856, %v874
        %v893 = vadd.f32 %v881, %v887
        %v894 = vadd.f32 %v882, %v888
        %v895 = vadd.f32 %v883, %v889
        %v896 = vadd.f32 %v884, %v890
        %v897 = vadd.f32 %v885, %v891
        %v898 = vadd.f32 %v886, %v892
        %v899 = vtanh.pop %v893
        %v900 = vtanh.pop %v894
        %v901 = vtanh.pop %v895
        %v902 = vtanh.pop %v896
        %v903 = vtanh.pop %v897
        %v904 = vtanh.pop %v898
        %v905 = vmul.f32 %v863, %v899
        %v906 = vmul.f32 %v864, %v900
        %v907 = vmul.f32 %v865, %v901
        %v908 = vmul.f32 %v866, %v902
        %v909 = vmul.f32 %v867, %v903
        %v910 = vmul.f32 %v868, %v904
        %911 = vst [vmem:[%s462] sm:$0xff] %v893
        %912 = vst [vmem:[%s462 + $0x8] sm:$0xff] %v894
        %913 = vst [vmem:[%s462 + $0x10] sm:$0xff] %v895
        %914 = vst [vmem:[%s462 + $0x18] sm:$0xff] %v896
        %915 = vst [vmem:[%s462 + $0x20] sm:$0xff] %v897
        %916 = vst [vmem:[%s462 + $0x28] sm:$0xff] %v898
        %917 = vst [vmem:[%s456] sm:$0xff] %v905
        %918 = vst [vmem:[%s456 + $0x8] sm:$0xff] %v906
        %919 = vst [vmem:[%s456 + $0x10] sm:$0xff] %v907
        %920 = vst [vmem:[%s456 + $0x18] sm:$0xff] %v908
        %921 = vst [vmem:[%s456 + $0x20] sm:$0xff] %v909
        %922 = vst [vmem:[%s456 + $0x28] sm:$0xff] %v910
        %v923 = vld [vmem:[%s4] sm:$0xf]
        %vm924 = vcmask 195584
        %v926 = vsel %vm924, %v923, 0
        %928 = vmatprep.subr.mxu0 0.0
        %929 = vmatpush1.msra.mxu0 0.0
        %930 = vmatprep.subr.mxu0 0.0
        %931 = vmatpush1.msra.mxu0 0.0
        %932 = vmatprep.subr.mxu0 0.0
        %933 = vmatpush1.msra.mxu0 0.0
        %934 = vmatprep.subr.mxu0 0.0
        %935 = vmatpush1.msra.mxu0 0.0
        %936 = vmatprep.subr.mxu0 0.0
        %937 = vmatpush1.msra.mxu0 0.0
        %938 = vmatprep.subr.mxu0 0.0
        %939 = vmatpush1.msra.mxu0 0.0
        %940 = vmatprep.subr.mxu0 0.0
        %941 = vmatpush1.msra.mxu0 0.0
        %942 = vmatprep.subr.mxu0 0.0
        %943 = vmatpush1.msra.mxu0 0.0
        %944 = vmatprep.subr.mxu0 0.0
        %945 = vmatpush1.msra.mxu0 0.0
        %946 = vmatprep.subr.mxu0 0.0
        %947 = vmatpush1.msra.mxu0 0.0
        %948 = vmatprep.subr.mxu0 0.0
        %949 = vmatpush1.msra.mxu0 0.0
        %950 = vmatprep.subr.mxu0 0.0
        %951 = vmatpush1.msra.mxu0 0.0
        %952 = vmatprep.subr.mxu0 0.0
        %953 = vmatpush1.msra.mxu0 0.0
        %954 = vmatprep.subr.mxu0 %v910
        %955 = vmatpush1.msra.mxu0 %v909
        %956 = vmatprep.subr.mxu0 %v908
        %957 = vmatpush1.msra.mxu0 %v907
        %958 = vmatprep.subr.mxu0 %v906
        %959 = vmatpush1.msra.mxu0 %v905
        %960 = vmatprep.subr.mxu0 0.0
        %961 = vmatpush2.msra.mxu0 0.0
        %962 = vmatprep.subr.mxu0 0.0
        %963 = vmatpush2.msra.mxu0 0.0
        %964 = vmatprep.subr.mxu0 0.0
        %965 = vmatpush2.msra.mxu0 0.0
        %966 = vmatprep.subr.mxu0 0.0
        %967 = vmatpush2.msra.mxu0 0.0
        %968 = vmatprep.subr.mxu0 0.0
        %969 = vmatpush2.msra.mxu0 0.0
        %970 = vmatprep.subr.mxu0 0.0
        %971 = vmatpush2.msra.mxu0 0.0
        %972 = vmatprep.subr.mxu0 0.0
        %973 = vmatpush2.msra.mxu0 0.0
        %974 = vmatprep.subr.mxu0 0.0
        %975 = vmatpush2.msra.mxu0 0.0
        %976 = vmatprep.subr.mxu0 0.0
        %977 = vmatpush2.msra.mxu0 0.0
        %978 = vmatprep.subr.mxu0 0.0
        %979 = vmatpush2.msra.mxu0 0.0
        %980 = vmatprep.subr.mxu0 0.0
        %981 = vmatpush2.msra.mxu0 0.0
        %982 = vmatprep.subr.mxu0 0.0
        %983 = vmatpush2.msra.mxu0 0.0
        %984 = vmatprep.subr.mxu0 0.0
        %985 = vmatpush2.msra.mxu0 0.0
        %986 = vmatprep.subr.mxu0 0.0
        %987 = vmatpush2.msra.mxu0 0.0
        %988 = vmatprep.subr.mxu0 0.0
        %989 = vmatpush2.msra.mxu0 0.0
        %990 = vmatprep.subr.mxu0 0.0
        %991 = vmatpush2.msra.mxu0 0.0
        %992 = vmatprep.mubr.f32.mxu0 0.0
        %993 = vmatmul.mubr.f32.gmra.mxu0 %v926
        %v994 = vpop.f32.mrf.mxu0
        %v995 = vadd.f32 0.0, %v994
        %v996 = vpop.f32.mrf.mxu0
        %v997 = vadd.f32 0.0, %v996
        %998 = vdwg.mxu0
        %v1001 = vcombine.low %v995, %v997
        %1003 = vst [vmem:[%s469] sm:$0xff] %v1001
        %s1004 = smul.u32 2, %s19
        %p1005 = scmp.lt.s32.totalorder %s1004, 3
        %s1006 = scalar_select %p1005, %s1004, 3
        %s1007 = smul.addr %s1006, 4
        %s1008 = scalar_lea.vmem %s5, %s1007
        %s1009 = sand.u32 %s168, 1
        %s1010 = sand.u32 %s168, 1
        %s1011 = smul.addr %s1010, 48
        %s1012 = scalar_lea.vmem [#allocation4], %s1011
        %s1013 = sand.u32 %s194, 1
        %s1014 = sand.u32 %s194, 1
        %s1015 = smul.addr %s1014, 48
        %s1016 = scalar_lea.vmem [#allocation5], %s1015
        // Predicated region
        $region87: #{grad_update_lstm_forward.1} parent=77 // pred_check
          %p1017 = pneg %p152
        $region88: #{grad_update_lstm_forward.1} parent=77 // pred_check_branch
          %1019 = sbr.rel (%p1017) target = $region90
        $region89: #{grad_update_lstm_forward.1} parent=77 // pred_region
          %s1020 = smul.u32 2, %s19
        $region90: #{grad_update_lstm_forward.1} parent=77 // pred_fallthru
          _
        // Predicated region
        $region91: #{grad_update_lstm_forward.1} parent=77 // pred_check
          %p1021 = pneg %p178
        $region92: #{grad_update_lstm_forward.1} parent=77 // pred_check_branch
          %1023 = sbr.rel (%p1021) target = $region94
        $region93: #{grad_update_lstm_forward.1} parent=77 // pred_region
          %s1024 = smul.u32 2, %s19
          %s1025 = smul.addr %s1024, 8
          %s1026 = scalar_lea.vmem %s6, %s1025
          // Predicated region
          $region95: #{grad_update_lstm_forward.1} parent=93 // pred_check
            _
          $region96: #{grad_update_lstm_forward.1} parent=93 // pred_check_branch
            %1028 = sbr.rel (0) target = $region98
          $region97: #{grad_update_lstm_forward.1} parent=93 // pred_region
            // Predicated region
            $region99: #{grad_update_lstm_forward.1} parent=97 // pred_check
              _
            $region100: #{grad_update_lstm_forward.1} parent=97 // pred_check_branch
              %1030 = sbr.rel (0) target = $region102
            $region101: #{grad_update_lstm_forward.1} parent=97 // pred_region
              loop: start=0, step=1, limit=1
              $region103: #{grad_update_lstm_forward.1} parent=101 // loop_pre_header
                _
              $region104: #{grad_update_lstm_forward.1} parent=101 // loop_header
                %s1032 = sphi 0, %s1036
                %p1033 = scmp.ge.s32.totalorder %s1032, 1
                %s1037 = sphi %s1012, %s1012
                %s1038 = sphi %s1026, %s1026
              $region105: #{grad_update_lstm_forward.1} parent=101 // loop_header_branch
                %1035 = sbr.rel (%p1033) target = $region109
              $region106: #{grad_update_lstm_forward.1} parent=101 // loop_body
                %v1039 = vld [vmem:[%s1037] sm:$0xff]
                %1040 = vst [vmem:[%s1038] sm:$0xff] %v1039
                %v1041 = vld [vmem:[%s1037 + $0x8] sm:$0xff]
                %1042 = vst [vmem:[%s1038 + $0x8] sm:$0xff] %v1041
                %v1043 = vld [vmem:[%s1037 + $0x10] sm:$0xff]
                %1044 = vst [vmem:[%s1038 + $0x20] sm:$0xff] %v1043
                %v1045 = vld [vmem:[%s1037 + $0x18] sm:$0xff]
                %1046 = vst [vmem:[%s1038 + $0x28] sm:$0xff] %v1045
                %v1047 = vld [vmem:[%s1037 + $0x20] sm:$0xff]
                %1048 = vst [vmem:[%s1038 + $0x40] sm:$0xff] %v1047
                %v1049 = vld [vmem:[%s1037 + $0x28] sm:$0xff]
                %1050 = vst [vmem:[%s1038 + $0x48] sm:$0xff] %v1049
              $region107: #{grad_update_lstm_forward.1} parent=101 // loop_footer
                %s1036 = sadd.s32 1, %s1032
              $region108: #{grad_update_lstm_forward.1} parent=101 // loop_footer_branch
                %1031 = sbr.rel target = $region104
              $region109: #{grad_update_lstm_forward.1} parent=101 // loop_exit
                _
            $region102: #{grad_update_lstm_forward.1} parent=97 // pred_fallthru
              _
            // Predicated region
            $region110: #{grad_update_lstm_forward.1} parent=97 // pred_check
              _
            $region111: #{grad_update_lstm_forward.1} parent=97 // pred_check_branch
              %1052 = sbr.rel target = $region113
            $region112: #{grad_update_lstm_forward.1} parent=97 // pred_region
              _
            $region113: #{grad_update_lstm_forward.1} parent=97 // pred_fallthru
              _
          $region98: #{grad_update_lstm_forward.1} parent=93 // pred_fallthru
            _
          %1053 = vnop
        $region94: #{grad_update_lstm_forward.1} parent=77 // pred_fallthru
          _
        // Predicated region
        $region114: #{grad_update_lstm_forward.1} parent=77 // pred_check
          %p1054 = pneg %p204
        $region115: #{grad_update_lstm_forward.1} parent=77 // pred_check_branch
          %1056 = sbr.rel (%p1054) target = $region117
        $region116: #{grad_update_lstm_forward.1} parent=77 // pred_region
          %s1057 = smul.u32 2, %s19
          %s1058 = smul.addr %s1057, 8
          %s1059 = scalar_lea.vmem %s7, %s1058
          // Predicated region
          $region118: #{grad_update_lstm_forward.1} parent=116 // pred_check
            _
          $region119: #{grad_update_lstm_forward.1} parent=116 // pred_check_branch
            %1061 = sbr.rel (0) target = $region121
          $region120: #{grad_update_lstm_forward.1} parent=116 // pred_region
            // Predicated region
            $region122: #{grad_update_lstm_forward.1} parent=120 // pred_check
              _
            $region123: #{grad_update_lstm_forward.1} parent=120 // pred_check_branch
              %1063 = sbr.rel (0) target = $region125
            $region124: #{grad_update_lstm_forward.1} parent=120 // pred_region
              loop: start=0, step=1, limit=1
              $region126: #{grad_update_lstm_forward.1} parent=124 // loop_pre_header
                _
              $region127: #{grad_update_lstm_forward.1} parent=124 // loop_header
                %s1065 = sphi 0, %s1069
                %p1066 = scmp.ge.s32.totalorder %s1065, 1
                %s1070 = sphi %s1016, %s1016
                %s1071 = sphi %s1059, %s1059
              $region128: #{grad_update_lstm_forward.1} parent=124 // loop_header_branch
                %1068 = sbr.rel (%p1066) target = $region132
              $region129: #{grad_update_lstm_forward.1} parent=124 // loop_body
                %v1072 = vld [vmem:[%s1070] sm:$0xff]
                %1073 = vst [vmem:[%s1071] sm:$0xff] %v1072
                %v1074 = vld [vmem:[%s1070 + $0x8] sm:$0xff]
                %1075 = vst [vmem:[%s1071 + $0x8] sm:$0xff] %v1074
                %v1076 = vld [vmem:[%s1070 + $0x10] sm:$0xff]
                %1077 = vst [vmem:[%s1071 + $0x20] sm:$0xff] %v1076
                %v1078 = vld [vmem:[%s1070 + $0x18] sm:$0xff]
                %1079 = vst [vmem:[%s1071 + $0x28] sm:$0xff] %v1078
                %v1080 = vld [vmem:[%s1070 + $0x20] sm:$0xff]
                %1081 = vst [vmem:[%s1071 + $0x40] sm:$0xff] %v1080
                %v1082 = vld [vmem:[%s1070 + $0x28] sm:$0xff]
                %1083 = vst [vmem:[%s1071 + $0x48] sm:$0xff] %v1082
              $region130: #{grad_update_lstm_forward.1} parent=124 // loop_footer
                %s1069 = sadd.s32 1, %s1065
              $region131: #{grad_update_lstm_forward.1} parent=124 // loop_footer_branch
                %1064 = sbr.rel target = $region127
              $region132: #{grad_update_lstm_forward.1} parent=124 // loop_exit
                _
            $region125: #{grad_update_lstm_forward.1} parent=120 // pred_fallthru
              _
            // Predicated region
            $region133: #{grad_update_lstm_forward.1} parent=120 // pred_check
              _
            $region134: #{grad_update_lstm_forward.1} parent=120 // pred_check_branch
              %1085 = sbr.rel target = $region136
            $region135: #{grad_update_lstm_forward.1} parent=120 // pred_region
              _
            $region136: #{grad_update_lstm_forward.1} parent=120 // pred_fallthru
              _
          $region121: #{grad_update_lstm_forward.1} parent=116 // pred_fallthru
            _
          %1086 = vnop
        $region117: #{grad_update_lstm_forward.1} parent=77 // pred_fallthru
          _
      $region78: #{grad_update_lstm_forward.1} parent=5 // pred_fallthru
        _
      %p1087 = scmp.le.s32.totalorder 2, %s14
      // Predicated region
      $region137: #{grad_update_lstm_forward.1} parent=5 // pred_check
        %p1088 = pneg %p1087
      $region138: #{grad_update_lstm_forward.1} parent=5 // pred_check_branch
        %1090 = sbr.rel (%p1088) target = $region140
      $region139: #{grad_update_lstm_forward.1} parent=5 // pred_region
        %s1091 = ssub.s32 %s14, 2
        // Predicated region
        $region141: #{grad_update_lstm_forward.1} parent=139 // pred_check
          %p1092 = pneg %p158
        $region142: #{grad_update_lstm_forward.1} parent=139 // pred_check_branch
          %1094 = sbr.rel (%p1092) target = $region144
        $region143: #{grad_update_lstm_forward.1} parent=139 // pred_region
          %s1095 = smul.u32 2, %s20
          %p1096 = scmp.lt.s32.totalorder %s1095, 3
          %s1097 = scalar_select %p1096, %s1095, 3
          %s1098 = smul.addr %s1097, 4
          %s1099 = scalar_lea.vmem %s5, %s1098
        $region144: #{grad_update_lstm_forward.1} parent=139 // pred_fallthru
          _
        // Predicated region
        $region145: #{grad_update_lstm_forward.1} parent=139 // pred_check
          %p1100 = pneg %p184
        $region146: #{grad_update_lstm_forward.1} parent=139 // pred_check_branch
          %1102 = sbr.rel (%p1100) target = $region148
        $region147: #{grad_update_lstm_forward.1} parent=139 // pred_region
          %s1103 = sand.u32 %s169, 1
          %s1104 = sand.u32 %s169, 1
          %s1105 = smul.addr %s1104, 48
          %s1106 = scalar_lea.vmem [#allocation4], %s1105
        $region148: #{grad_update_lstm_forward.1} parent=139 // pred_fallthru
          _
        // Predicated region
        $region149: #{grad_update_lstm_forward.1} parent=139 // pred_check
          %p1107 = pneg %p210
        $region150: #{grad_update_lstm_forward.1} parent=139 // pred_check_branch
          %1109 = sbr.rel (%p1107) target = $region152
        $region151: #{grad_update_lstm_forward.1} parent=139 // pred_region
          %s1110 = sand.u32 %s195, 1
          %s1111 = sand.u32 %s195, 1
          %s1112 = smul.addr %s1111, 48
          %s1113 = scalar_lea.vmem [#allocation5], %s1112
        $region152: #{grad_update_lstm_forward.1} parent=139 // pred_fallthru
          _
      $region140: #{grad_update_lstm_forward.1} parent=5 // pred_fallthru
        _
    $region6: #{grad_update_lstm_forward.1} parent=1 // loop_footer
      %s18 = sadd.s32 1, %s14
    $region7: #{grad_update_lstm_forward.1} parent=1 // loop_footer_branch
      %13 = sbr.rel target = $region3
    $region8: #{grad_update_lstm_forward.1} parent=1 // loop_exit
      _

</llo_original>
